<compile_context>
chip_gen: v7x
topology: tpu7x:2x2x1
jax: 0.10.0
libtpu: 0.0.40
codegen_flags: <defaults>
</compile_context>

<pallas_src>
import functools

import jax
import jax.numpy as jnp
from jax import lax
from jax.experimental import pallas as pl
from jax.experimental.pallas import tpu as pltpu


# Explicit scoped-VMEM limit (v5e default is ~16 MiB; 32 MiB is safe on
# v5e/v6e/v7x and gives the pipeline headroom for double-buffered chunks).
_VMEM_LIMIT = 32 * 1024 * 1024


def _round_up(x, m):
    return ((x + m - 1) // m) * m


# --------------------------------------------------------------------------
# Generic tiled matmul + bias kernel (hoisted layer-0 input gates and the
# hoisted vocab projection).  Tiled over M and N; N padded to a tile multiple.
# --------------------------------------------------------------------------
def _matmul_bias_kernel(x_ref, w_ref, b_ref, o_ref):
    o_ref[...] = (jnp.dot(x_ref[...].astype(w_ref.dtype), w_ref[...],
                          preferred_element_type=jnp.float32)
                  + b_ref[...])


def matmul_bias(x, w, b, *, tm=256, tn=512, vmem_limit_bytes=_VMEM_LIMIT):
    """(M, K) @ (K, N) + (1, N) -> (M, N), tiled over M and N."""
    M, K = x.shape
    _, N = w.shape

    tn_eff = min(tn, _round_up(N, 128))        # lane-dense, MXU-wide tiles
    Np = _round_up(N, tn_eff)
    tm_eff = min(tm, _round_up(M, 8))          # sublane-aligned M tiles
    Mp = _round_up(M, tm_eff)

    if Mp != M:
        x = jnp.pad(x, ((0, Mp - M), (0, 0)))
    if Np != N:
        w = jnp.pad(w, ((0, 0), (0, Np - N)))
        b = jnp.pad(b, ((0, 0), (0, Np - N)))

    grid = (Mp // tm_eff, Np // tn_eff)
    out = pl.pallas_call(
        _matmul_bias_kernel,
        out_shape=jax.ShapeDtypeStruct((Mp, Np), jnp.float32),
        grid_spec=pltpu.PrefetchScalarGridSpec(
            num_scalar_prefetch=0,
            grid=grid,
            in_specs=[
                pl.BlockSpec((tm_eff, K), lambda i, j: (i, 0)),
                pl.BlockSpec((K, tn_eff), lambda i, j: (0, j)),
                pl.BlockSpec((1, tn_eff), lambda i, j: (0, j)),
            ],
            out_specs=pl.BlockSpec((tm_eff, tn_eff), lambda i, j: (i, j)),
        ),
        compiler_params=pltpu.CompilerParams(
            dimension_semantics=("parallel", "parallel"),
            vmem_limit_bytes=vmem_limit_bytes),
    )(x, w, b)
    return out[:M, :N]


# --------------------------------------------------------------------------
# 2-layer LSTM recurrence kernel, streamed over time chunks.
#   xg_ref : (Tc, Bt, 4H)  precomputed  x_t @ W_ih0 + (b_ih0 + b_hh0)  chunk
#   whh0   : (H, 4H)       layer-0 recurrent weight (resident)
#   w1     : (2H, 4H)      stacked [W_ih1; W_hh1] for the fused layer-1 dot
#   b1     : (1, 4H)       b_ih1 + b_hh1
#   out    : (Tc, Bt, H)   layer-1 hidden states for this chunk
# Scratch persisting across grid steps:
#   h01_s  : (Bt, 2H)      [h0_prev | h1_prev]  (in-place, no per-step concat)
#   c0_s   : (Bt, H)       layer-0 cell state
#   c1_s   : (Bt, H)       layer-1 cell state
# --------------------------------------------------------------------------
def _lstm2_kernel(xg_ref, whh0_ref, w1_ref, b1_ref, out_ref,
                  h01_s, c0_s, c1_s, *, hidden_size, t_chunk):
    H = hidden_size
    Bt = h01_s.shape[0]

    # zero initial hidden/cell state at the first time chunk of each batch tile
    @pl.when(pl.program_id(1) == 0)
    def _init():
        h01_s[...] = jnp.zeros_like(h01_s)
        c0_s[...] = jnp.zeros_like(c0_s)
        c1_s[...] = jnp.zeros_like(c1_s)

    # loop-invariant layer-1 bias, broadcast ONCE (JAX does not CSE broadcasts)
    b1v = pl.broadcast_to(b1_ref[...], (Bt, 4 * H))
    wdt = w1_ref.dtype

    def gates_to_hc(gates, c_prev):
        # PyTorch gate order: i, f, g, o — lane-aligned slices (H % 128 == 0)
        i = jax.nn.sigmoid(gates[:, 0 * H:1 * H])
        f = jax.nn.sigmoid(gates[:, 1 * H:2 * H])
        g = jnp.tanh(gates[:, 2 * H:3 * H])
        o = jax.nn.sigmoid(gates[:, 3 * H:4 * H])
        c = f * c_prev + i * g
        h = o * jnp.tanh(c)
        return h, c

    # ---- prologue: layer-0 step for local time 0 -----------------------------
    g0 = xg_ref[0] + jnp.dot(h01_s[:, :H].astype(wdt), whh0_ref[...],
                             preferred_element_type=jnp.float32)
    h0, c0 = gates_to_hc(g0, c0_s[...])
    c0_s[...] = c0
    h01_s[:, :H] = h0

    # ---- wavefront main loop: per iteration j, the two dots are independent:
    #   layer-1 @ local time j-1  (reads [h0(j-1) | h1(j-2)])
    #   layer-0 @ local time j    (reads h0(j-1))
    def step(j, carry):
        xin = h01_s[...].astype(wdt)                         # [h0_prev | h1_prev]
        g1 = jnp.dot(xin, w1_ref[...],
                     preferred_element_type=jnp.float32) + b1v
        g0 = xg_ref[j] + jnp.dot(xin[:, :H], whh0_ref[...],
                                 preferred_element_type=jnp.float32)
        h1, c1 = gates_to_hc(g1, c1_s[...])
        c1_s[...] = c1
        out_ref[j - 1] = h1
        h01_s[:, H:] = h1
        h0n, c0n = gates_to_hc(g0, c0_s[...])
        c0_s[...] = c0n
        h01_s[:, :H] = h0n
        return carry

    lax.fori_loop(1, t_chunk, step, 0,
                  unroll=True if t_chunk <= 16 else 4)

    # ---- epilogue: layer-1 step for local time t_chunk-1 ---------------------
    xin = h01_s[...].astype(wdt)
    g1 = jnp.dot(xin, w1_ref[...],
                 preferred_element_type=jnp.float32) + b1v
    h1, c1 = gates_to_hc(g1, c1_s[...])
    c1_s[...] = c1
    out_ref[t_chunk - 1] = h1
    h01_s[:, H:] = h1


def _run_lstm2(xg, whh0, w1, b1, *, t_chunk, vmem_limit_bytes=_VMEM_LIMIT):
    """xg: (Tp, Bp, 4H) f32 (Tp % t_chunk == 0) -> layer-1 hiddens (Tp, Bp, H)."""
    Tp, Bp, H4 = xg.shape
    H = H4 // 4
    assert Tp % t_chunk == 0

    # batch tiles: <=64 rows per TensorCore (keeps (Bt,4H) gate tensors in vregs)
    Bt = Bp if Bp <= 64 else 64
    assert Bp % Bt == 0
    n_b, n_t = Bp // Bt, Tp // t_chunk

    kernel = functools.partial(_lstm2_kernel, hidden_size=H, t_chunk=t_chunk)
    return pl.pallas_call(
        kernel,
        out_shape=jax.ShapeDtypeStruct((Tp, Bp, H), jnp.float32),
        grid_spec=pltpu.PrefetchScalarGridSpec(
            num_scalar_prefetch=0,
            grid=(n_b, n_t),                    # (batch tiles, time chunks)
            in_specs=[
                pl.BlockSpec((t_chunk, Bt, 4 * H), lambda b, t: (t, b, 0)),
                pl.BlockSpec((H, 4 * H), lambda b, t: (0, 0)),
                pl.BlockSpec((2 * H, 4 * H), lambda b, t: (0, 0)),
                pl.BlockSpec((1, 4 * H), lambda b, t: (0, 0)),
            ],
            out_specs=pl.BlockSpec((t_chunk, Bt, H), lambda b, t: (t, b, 0)),
            scratch_shapes=[
                pltpu.VMEM((Bt, 2 * H), jnp.float32),   # [h0 | h1] persistent
                pltpu.VMEM((Bt, H), jnp.float32),       # c layer 0
                pltpu.VMEM((Bt, H), jnp.float32),       # c layer 1
            ],
        ),
        compiler_params=pltpu.CompilerParams(
            dimension_semantics=("parallel", "arbitrary"),
            vmem_limit_bytes=vmem_limit_bytes),
    )(xg, whh0, w1, b1)


# --------------------------------------------------------------------------
# Full forward pass
# --------------------------------------------------------------------------
def decoder_rnn_forward(features, captions, lengths, params, *,
                        t_chunk=8, weight_dtype=jnp.float32):
    """features: (B, E) f32, captions: (B, S) i32, lengths: python ints sorted desc."""
    # --- plain-JAX glue: embedding lookup + feature concat --------------------
    emb = params["embed"][captions]                             # (B, S, E)
    x = jnp.concatenate([features[:, None, :], emb], axis=1)    # (B, T, E)
    x = jnp.transpose(x, (1, 0, 2)).astype(jnp.float32)         # (T, B, E) time-major
    T, B, E = x.shape
    H = params["whh0"].shape[0]
    V = params["wlin"].shape[1]

    # pad batch to sublane granularity (and to 64-row tiles when large so the
    # recurrence can shard across the two v7x TensorCores)
    Bp = _round_up(max(B, 8), 8)
    if Bp > 64:
        Bp = _round_up(Bp, 64)
    if Bp != B:
        x = jnp.pad(x, ((0, 0), (0, Bp - B), (0, 0)))

    # pad time to a multiple of the chunk so the recurrence streams chunk-wise
    tc = min(t_chunk, T)
    Tp = _round_up(T, tc)
    if Tp != T:
        x = jnp.pad(x, ((0, Tp - T), (0, 0), (0, 0)))

    # TODO(synk): flip weight_dtype to jnp.bfloat16 on v6e/v7x (accumulation
    # stays f32 via preferred_element_type); loosen the 2e-3 check accordingly.
    wd = weight_dtype

    # --- hoisted layer-0 input gates: one big (Tp*Bp, E) x (E, 4H) matmul -----
    xg = matmul_bias(x.reshape(Tp * Bp, E),
                     params["wih0"].astype(wd), params["b0"])
    xg = xg.reshape(Tp, Bp, 4 * H)

    # --- sequential 2-layer LSTM (chunk-streamed, wavefront-pipelined) --------
    w1 = jnp.concatenate([params["wih1"], params["whh1"]], axis=0).astype(wd)
    h1_seq = _run_lstm2(xg, params["whh0"].astype(wd), w1, params["b1"],
                        t_chunk=tc)                              # (Tp, Bp, H)

    # --- hoisted vocab projection on the valid (T, B) rows only ---------------
    h_valid = h1_seq[:T, :B, :].reshape(T * B, H)
    logits = matmul_bias(h_valid, params["wlin"].astype(wd), params["blin"])
    logits = logits.reshape(T, B, V)

    # --- pack_padded_sequence gather (valid steps, time-major packed order) ---
    rows = []
    for t in range(T):
        bs = sum(1 for l in lengths if l > t)
        if bs == 0:
            break
        rows.append(logits[t, :bs, :])
    return jnp.concatenate(rows, axis=0)              # (sum(lengths), V)


# --------------------------------------------------------------------------
# Pure-JAX reference with identical semantics (for validation)
# --------------------------------------------------------------------------
def decoder_rnn_reference(features, captions, lengths, params):
    emb = params["embed"][captions]
    x = jnp.concatenate([features[:, None, :], emb], axis=1)    # (B, T, E)
    B, T, _ = x.shape
    H = params["whh0"].shape[0]

    def run_layer(seq_tm, wih, whh, b):                         # seq_tm: (T, B, in)
        def step(carry, xt):
            h, c = carry
            gates = xt @ wih + h @ whh + b
            i = jax.nn.sigmoid(gates[:, :H])
            f = jax.nn.sigmoid(gates[:, H:2 * H])
            g = jnp.tanh(gates[:, 2 * H:3 * H])
            o = jax.nn.sigmoid(gates[:, 3 * H:])
            c = f * c + i * g
            h = o * jnp.tanh(c)
            return (h, c), h
        init = (jnp.zeros((B, H), jnp.float32), jnp.zeros((B, H), jnp.float32))
        _, hs = jax.lax.scan(step, init, seq_tm)
        return hs                                               # (T, B, H)

    h0 = run_layer(jnp.transpose(x, (1, 0, 2)), params["wih0"], params["whh0"],
                   params["b0"][0])
    h1 = run_layer(h0, params["wih1"], params["whh1"], params["b1"][0])
    logits = h1 @ params["wlin"] + params["blin"][0]            # (T, B, V)
    rows = []
    for t in range(T):
        bs = sum(1 for l in lengths if l > t)
        if bs == 0:
            break
        rows.append(logits[t, :bs, :])
    return jnp.concatenate(rows, axis=0)


def init_params(key, embed_size, hidden_size, vocab_size):
    """Deterministic synthetic init mirroring the nn.Module's parameter shapes."""
    ks = jax.random.split(key, 10)
    H, E, V = hidden_size, embed_size, vocab_size
    k = 1.0 / jnp.sqrt(H)
    u = lambda kk, shape: jax.random.uniform(kk, shape, jnp.float32, -k, k)
    return {
        # nn.Embedding(vocab_size, embed_size)
        "embed": jax.random.normal(ks[0], (V, E), jnp.float32),
        # nn.LSTM(E, H, num_layers=2): weights stored pre-transposed for x @ W
        "wih0": u(ks[1], (E, 4 * H)),
        "whh0": u(ks[2], (H, 4 * H)),
        "b0":   u(ks[3], (1, 4 * H)) + u(ks[4], (1, 4 * H)),   # b_ih + b_hh
        "wih1": u(ks[5], (H, 4 * H)),
        "whh1": u(ks[6], (H, 4 * H)),
        "b1":   u(ks[7], (1, 4 * H)) + u(ks[8], (1, 4 * H)),
        # nn.Linear(H, V): weight pre-transposed for h @ W
        "wlin": u(ks[9], (H, V)),
        "blin": jnp.zeros((1, V), jnp.float32),
    }


if __name__ == "__main__":
    # Small shapes consistent with the module's forward.  H, V are multiples of
    # 128 so gate slices / projection tiles are lane-aligned; B is padded to 8
    # (sublane granularity) and T to the time-chunk inside the wrapper.
    batch, seq = 4, 8
    embed_size, hidden_size, vocab_size, num_layers = 64, 128, 256, 2
    lengths = [9, 7, 5, 3]            # sorted descending (pack_padded_sequence default)

    key = jax.random.PRNGKey(0)
    kp, kf, kc = jax.random.split(key, 3)
    params = init_params(kp, embed_size, hidden_size, vocab_size)
    features = jax.random.normal(kf, (batch, embed_size), jnp.float32)
    captions = jax.random.randint(kc, (batch, seq), 0, vocab_size, jnp.int32)

    out = decoder_rnn_forward(features, captions, lengths, params)
    out = jax.block_until_ready(out)

    ref = decoder_rnn_reference(features, captions, lengths, params)
    assert out.shape == (sum(lengths), vocab_size), out.shape
    assert bool(jnp.all(jnp.isfinite(out)))
    max_err = float(jnp.max(jnp.abs(out - ref)))
    assert max_err < 2e-3, f"mismatch vs reference: {max_err}"

    print("KERNEL_OK")
</pallas_src>

<mosaic_0001>
module attributes {stable_mosaic.version = 11 : i64} {
  func.func @_matmul_bias_kernel(%arg0: i32, %arg1: i32, %arg2: memref<128x64xf32, #tpu.memory_space<vmem>>, %arg3: memref<64x512xf32, #tpu.memory_space<vmem>>, %arg4: memref<1x512xf32, #tpu.memory_space<vmem>>, %arg5: memref<128x512xf32, #tpu.memory_space<vmem>>) attributes {dimension_semantics = [#tpu.dimension_semantics<parallel>, #tpu.dimension_semantics<parallel>], iteration_bounds = array<i64: 1, 1>, scalar_prefetch = 0 : i64, scratch_operands = 0 : i64, tpu.core_type = #tpu.core_type<tc>, window_params = [{transform_indices = @transform_0, window_bounds = array<i64: 128, 64>}, {transform_indices = @transform_1, window_bounds = array<i64: 64, 512>}, {transform_indices = @transform_2, window_bounds = array<i64: 1, 512>}, {transform_indices = @transform_3, window_bounds = array<i64: 128, 512>}]} {
    %c0 = arith.constant 0 : index
    %c0_0 = arith.constant 0 : index
    %0 = vector.load %arg2[%c0, %c0_0] : memref<128x64xf32, #tpu.memory_space<vmem>>, vector<128x64xf32>
    %c0_1 = arith.constant 0 : index
    %c0_2 = arith.constant 0 : index
    %1 = vector.load %arg3[%c0_1, %c0_2] : memref<64x512xf32, #tpu.memory_space<vmem>>, vector<64x512xf32>
    %cst = arith.constant dense<0.000000e+00> : vector<128x512xf32>
    %2 = tpu.matmul %0, %1, %cst {dimension_numbers = #tpu.dot_dimension_numbers<[1], [0], [0], [1], [0, 0, 1, 1], [], []>} : vector<128x64xf32>, vector<64x512xf32>, vector<128x512xf32> -> vector<128x512xf32>
    %c0_3 = arith.constant 0 : index
    %c0_4 = arith.constant 0 : index
    %3 = vector.load %arg4[%c0_3, %c0_4] : memref<1x512xf32, #tpu.memory_space<vmem>>, vector<1x512xf32>
    %4 = vector.broadcast %3 : vector<1x512xf32> to vector<128x512xf32>
    %5 = arith.addf %2, %4 : vector<128x512xf32>
    %c0_5 = arith.constant 0 : index
    %c0_6 = arith.constant 0 : index
    %6 = vector.load %arg5[%c0_5, %c0_6] : memref<128x512xf32, #tpu.memory_space<vmem>>, vector<128x512xf32>
    tpu.vector_store %arg5[%c0_5, %c0_6], %5 {strides = array<i32>} : memref<128x512xf32, #tpu.memory_space<vmem>>, vector<128x512xf32>,
    return
  }
  func.func @transform_0(%arg0: i32, %arg1: i32) -> (i32, i32) {
    %c0_i32 = arith.constant 0 : i32
    %c0_i32_0 = arith.constant 0 : i32
    return %arg0, %c0_i32 : i32, i32
  }
  func.func @transform_1(%arg0: i32, %arg1: i32) -> (i32, i32) {
    %c0_i32 = arith.constant 0 : i32
    %c0_i32_0 = arith.constant 0 : i32
    return %c0_i32, %arg1 : i32, i32
  }
  func.func @transform_2(%arg0: i32, %arg1: i32) -> (i32, i32) {
    %c0_i32 = arith.constant 0 : i32
    %c0_i32_0 = arith.constant 0 : i32
    return %c0_i32, %arg1 : i32, i32
  }
  func.func @transform_3(%arg0: i32, %arg1: i32) -> (i32, i32) {
    %c0_i32 = arith.constant 0 : i32
    return %arg0, %arg1 : i32, i32
  }
}

</mosaic_0001>

<llo_original>
// kernel: tpu_custom_call.1
$region0: #{tpu_custom_call.1}
  #allocation0 [shape = 'u32[]', space=smem, size = 0x4, offset = 0x4, fixed_abs, tag = 'smem constant byte address 0x4 - core index']
  #allocation1 [shape = 'u32[144,128]{1,0:T(1,128)}', space=vmem, size = 0x12000, scoped, tag = 'internal scratch']
  %s0 = inlined_call_operand.vmem [shape: f32[128,64], index: 0, kind: input, shape index: {}]
  %s1 = inlined_call_operand.hbm [shape: f32[64,512], index: 1, kind: input, shape index: {}]
  %s2 = inlined_call_operand.vmem [shape: f32[1,512], index: 2, kind: input, shape index: {}]
  %s3 = inlined_call_operand.hbm [shape: f32[128,512], index: 3, kind: output, shape index: {}]
  %s4 = sld [smem:[#allocation0]]
  $region26: #{tpu_custom_call.1} parent=0
    _
  %s6 = ssub.s32 1, %s4
  %s7 = scalar_select 0, %s6, %s4
  $region1: #{tpu_custom_call.1} parent=0
    #allocation2 [shape = 'u8[131072]{0}', space=vmem, size = 0x20000, scoped, tag = 'input window, operand 1, single buffered']
    #allocation3 [shape = 's32[1]{0}', space=sflag, size = 0x4, scoped, tag = 'scoped memory for tpu_custom_call.1']
    #allocation4 [shape = 's32[1]{0}', space=sflag, size = 0x4, scoped, tag = 'scoped memory for tpu_custom_call.1']
    #allocation5 [shape = 'u8[262144]{0}', space=vmem, size = 0x40000, scoped, tag = 'output window, operand 0, single buffered']
    %8 = vsyncpa [#allocation3], 0
    %9 = vsyncpa [#allocation4], 0
    // Predicated region
    $region2: #{tpu_custom_call.1} parent=1 // pred_check
      _
    $region3: #{tpu_custom_call.1} parent=1 // pred_check_branch
      %11 = sbr.rel (0) target = $region5
    $region4: #{tpu_custom_call.1} parent=1 // pred_region
      _
    $region5: #{tpu_custom_call.1} parent=1 // pred_fallthru
      _
    // Predicated region
    $region6: #{tpu_custom_call.1} parent=1 // pred_check
      _
    $region7: #{tpu_custom_call.1} parent=1 // pred_check_branch
      %13 = sbr.rel (0) target = $region9
    $region8: #{tpu_custom_call.1} parent=1 // pred_region
      %s15 = ssub.s32 4096, 4096
      %16 = vsyncadd [#allocation3], %s15
      %s17 = sshll.u32 [#allocation2], 4
      %s18 = int_to_ptr.vmem [resolvable:$true] %s17
      %23 = dma.hbm_to_vmem [thread:$0]  %s1, 4096, %s18, [#allocation3], 512, 512, 32
    $region9: #{tpu_custom_call.1} parent=1 // pred_fallthru
      _
    // Predicated region
    $region10: #{tpu_custom_call.1} parent=1 // pred_check
      _
    $region11: #{tpu_custom_call.1} parent=1 // pred_check_branch
      %25 = sbr.rel (0) target = $region13
    $region12: #{tpu_custom_call.1} parent=1 // pred_region
      _
    $region13: #{tpu_custom_call.1} parent=1 // pred_fallthru
      _
    // Predicated region
    $region14: #{tpu_custom_call.1} parent=1 // pred_check
      _
    $region15: #{tpu_custom_call.1} parent=1 // pred_check_branch
      %27 = sbr.rel (0) target = $region17
    $region16: #{tpu_custom_call.1} parent=1 // pred_region
      %28 = dma.done [#allocation3], 4096
    $region17: #{tpu_custom_call.1} parent=1 // pred_fallthru
      _
    %v29 = vld [vmem:[%s0] sm:$0xff]
    %v30 = vld [vmem:[%s0 + $0x8] sm:$0xff]
    %v31 = vld [vmem:[%s0 + $0x10] sm:$0xff]
    %v32 = vld [vmem:[%s0 + $0x18] sm:$0xff]
    %v33 = vld [vmem:[%s0 + $0x20] sm:$0xff]
    %v34 = vld [vmem:[%s0 + $0x28] sm:$0xff]
    %v35 = vld [vmem:[%s0 + $0x30] sm:$0xff]
    %v36 = vld [vmem:[%s0 + $0x38] sm:$0xff]
    %v37 = vld [vmem:[%s0 + $0x40] sm:$0xff]
    %v38 = vld [vmem:[%s0 + $0x48] sm:$0xff]
    %v39 = vld [vmem:[%s0 + $0x50] sm:$0xff]
    %v40 = vld [vmem:[%s0 + $0x58] sm:$0xff]
    %v41 = vld [vmem:[%s0 + $0x60] sm:$0xff]
    %v42 = vld [vmem:[%s0 + $0x68] sm:$0xff]
    %v43 = vld [vmem:[%s0 + $0x70] sm:$0xff]
    %v44 = vld [vmem:[%s0 + $0x78] sm:$0xff]
    %v45 = vld [vmem:[#allocation2] sm:$0xff]
    %v46 = vld [vmem:[#allocation2 + $0x8] sm:$0xff]
    %v47 = vld [vmem:[#allocation2 + $0x10] sm:$0xff]
    %v48 = vld [vmem:[#allocation2 + $0x18] sm:$0xff]
    %v49 = vld [vmem:[#allocation2 + $0x20] sm:$0xff]
    %v50 = vld [vmem:[#allocation2 + $0x28] sm:$0xff]
    %v51 = vld [vmem:[#allocation2 + $0x30] sm:$0xff]
    %v52 = vld [vmem:[#allocation2 + $0x38] sm:$0xff]
    %v53 = vld [vmem:[#allocation2 + $0x40] sm:$0xff]
    %v54 = vld [vmem:[#allocation2 + $0x48] sm:$0xff]
    %v55 = vld [vmem:[#allocation2 + $0x50] sm:$0xff]
    %v56 = vld [vmem:[#allocation2 + $0x58] sm:$0xff]
    %v57 = vld [vmem:[#allocation2 + $0x60] sm:$0xff]
    %v58 = vld [vmem:[#allocation2 + $0x68] sm:$0xff]
    %v59 = vld [vmem:[#allocation2 + $0x70] sm:$0xff]
    %v60 = vld [vmem:[#allocation2 + $0x78] sm:$0xff]
    %v61 = vld [vmem:[#allocation2 + $0x80] sm:$0xff]
    %v62 = vld [vmem:[#allocation2 + $0x88] sm:$0xff]
    %v63 = vld [vmem:[#allocation2 + $0x90] sm:$0xff]
    %v64 = vld [vmem:[#allocation2 + $0x98] sm:$0xff]
    %v65 = vld [vmem:[#allocation2 + $0xa0] sm:$0xff]
    %v66 = vld [vmem:[#allocation2 + $0xa8] sm:$0xff]
    %v67 = vld [vmem:[#allocation2 + $0xb0] sm:$0xff]
    %v68 = vld [vmem:[#allocation2 + $0xb8] sm:$0xff]
    %v69 = vld [vmem:[#allocation2 + $0xc0] sm:$0xff]
    %v70 = vld [vmem:[#allocation2 + $0xc8] sm:$0xff]
    %v71 = vld [vmem:[#allocation2 + $0xd0] sm:$0xff]
    %v72 = vld [vmem:[#allocation2 + $0xd8] sm:$0xff]
    %v73 = vld [vmem:[#allocation2 + $0xe0] sm:$0xff]
    %v74 = vld [vmem:[#allocation2 + $0xe8] sm:$0xff]
    %v75 = vld [vmem:[#allocation2 + $0xf0] sm:$0xff]
    %v76 = vld [vmem:[#allocation2 + $0xf8] sm:$0xff]
    %v77 = vld [vmem:[%s2] sm:$0xf]
    %v79 = vlaneseq
    %v80 = vshrl.u32 %v79, 7
    %v81 = vsub.s32 0, %v80
    %v82 = vrot.slane %v77, %v81
    %v83 = vlaneseq
    %v84 = vshrl.u32 %v83, 7
    %v85 = vsub.s32 1, %v84
    %v86 = vrot.slane %v77, %v85
    %v87 = vlaneseq
    %v88 = vshrl.u32 %v87, 7
    %v89 = vsub.s32 2, %v88
    %v90 = vrot.slane %v77, %v89
    %v91 = vlaneseq
    %v92 = vshrl.u32 %v91, 7
    %v93 = vsub.s32 3, %v92
    %v94 = vrot.slane %v77, %v93
    %vm99 = vcmask 523264
    %v101 = vsel %vm99, %v29, 0
    %v104 = vsel %vm99, %v30, 0
    %v107 = vsel %vm99, %v31, 0
    %v110 = vsel %vm99, %v32, 0
    %v113 = vsel %vm99, %v33, 0
    %v116 = vsel %vm99, %v34, 0
    %v119 = vsel %vm99, %v35, 0
    %v122 = vsel %vm99, %v36, 0
    %v125 = vsel %vm99, %v37, 0
    %v128 = vsel %vm99, %v38, 0
    %v131 = vsel %vm99, %v39, 0
    %v134 = vsel %vm99, %v40, 0
    %v137 = vsel %vm99, %v41, 0
    %v140 = vsel %vm99, %v42, 0
    %v143 = vsel %vm99, %v43, 0
    %v146 = vsel %vm99, %v44, 0
    %148 = vmatprep.subr.mxu0 %v46
    %149 = vmatpush1.msra.mxu0 %v45
    %150 = vmatprep.subr.mxu0 %v50
    %151 = vmatpush1.msra.mxu0 %v49
    %152 = vmatprep.subr.mxu0 %v54
    %153 = vmatpush1.msra.mxu0 %v53
    %154 = vmatprep.subr.mxu0 %v58
    %155 = vmatpush1.msra.mxu0 %v57
    %156 = vmatprep.subr.mxu0 %v62
    %157 = vmatpush1.msra.mxu0 %v61
    %158 = vmatprep.subr.mxu0 %v66
    %159 = vmatpush1.msra.mxu0 %v65
    %160 = vmatprep.subr.mxu0 %v70
    %161 = vmatpush1.msra.mxu0 %v69
    %162 = vmatprep.subr.mxu0 %v74
    %163 = vmatpush1.msra.mxu0 %v73
    %164 = vmatprep.subr.mxu0 0.0
    %165 = vmatpush1.msra.mxu0 0.0
    %166 = vmatprep.subr.mxu0 0.0
    %167 = vmatpush1.msra.mxu0 0.0
    %168 = vmatprep.subr.mxu0 0.0
    %169 = vmatpush1.msra.mxu0 0.0
    %170 = vmatprep.subr.mxu0 0.0
    %171 = vmatpush1.msra.mxu0 0.0
    %172 = vmatprep.subr.mxu0 0.0
    %173 = vmatpush1.msra.mxu0 0.0
    %174 = vmatprep.subr.mxu0 0.0
    %175 = vmatpush1.msra.mxu0 0.0
    %176 = vmatprep.subr.mxu0 0.0
    %177 = vmatpush1.msra.mxu0 0.0
    %178 = vmatprep.subr.mxu0 0.0
    %179 = vmatpush1.msra.mxu0 0.0
    %180 = vmatprep.subr.mxu0 0.0
    %181 = vmatpush1.msra.mxu0 0.0
    %182 = vmatprep.subr.mxu0 0.0
    %183 = vmatpush1.msra.mxu0 0.0
    %184 = vmatprep.subr.mxu0 0.0
    %185 = vmatpush1.msra.mxu0 0.0
    %186 = vmatprep.subr.mxu0 0.0
    %187 = vmatpush1.msra.mxu0 0.0
    %188 = vmatprep.subr.mxu0 0.0
    %189 = vmatpush1.msra.mxu0 0.0
    %190 = vmatprep.subr.mxu0 0.0
    %191 = vmatpush1.msra.mxu0 0.0
    %192 = vmatprep.subr.mxu0 0.0
    %193 = vmatpush1.msra.mxu0 0.0
    %194 = vmatprep.subr.mxu0 0.0
    %195 = vmatpush1.msra.mxu0 0.0
    %196 = vmatprep.subr.mxu0 0.0
    %197 = vmatpush1.msra.mxu0 0.0
    %198 = vmatprep.subr.mxu0 0.0
    %199 = vmatpush1.msra.mxu0 0.0
    %200 = vmatprep.subr.mxu0 0.0
    %201 = vmatpush1.msra.mxu0 0.0
    %202 = vmatprep.subr.mxu0 0.0
    %203 = vmatpush1.msra.mxu0 0.0
    %204 = vmatprep.subr.mxu0 0.0
    %205 = vmatpush1.msra.mxu0 0.0
    %206 = vmatprep.subr.mxu0 0.0
    %207 = vmatpush1.msra.mxu0 0.0
    %208 = vmatprep.subr.mxu0 0.0
    %209 = vmatpush1.msra.mxu0 0.0
    %210 = vmatprep.subr.mxu0 0.0
    %211 = vmatpush1.msra.mxu0 0.0
    %212 = vmatprep.mubr.f32.mxu0 0.0
    %213 = vmatmul.mubr.f32.gmra.mrb[0].mxu0 %v101
    %v214 = vpop.f32.mrb[0].mxu0
    %v215 = vadd.f32 %v82, %v214
    %v216 = vpop.f32.mrb[0].mxu0
    %v217 = vadd.f32 %v86, %v216
    %218 = vmatprep.mubr.f32.mxu0 0.0
    %219 = vmatmul.mubr.f32.gmra.mrb[0].mxu0 %v104
    %v220 = vpop.f32.mrb[0].mxu0
    %v221 = vadd.f32 %v82, %v220
    %v222 = vpop.f32.mrb[0].mxu0
    %v223 = vadd.f32 %v86, %v222
    %224 = vmatprep.mubr.f32.mxu0 0.0
    %225 = vmatmul.mubr.f32.gmra.mrb[0].mxu0 %v107
    %v226 = vpop.f32.mrb[0].mxu0
    %v227 = vadd.f32 %v82, %v226
    %v228 = vpop.f32.mrb[0].mxu0
    %v229 = vadd.f32 %v86, %v228
    %230 = vmatprep.mubr.f32.mxu0 0.0
    %231 = vmatmul.mubr.f32.gmra.mrb[0].mxu0 %v110
    %v232 = vpop.f32.mrb[0].mxu0
    %v233 = vadd.f32 %v82, %v232
    %v234 = vpop.f32.mrb[0].mxu0
    %v235 = vadd.f32 %v86, %v234
    %236 = vmatprep.mubr.f32.mxu0 0.0
    %237 = vmatmul.mubr.f32.gmra.mrb[0].mxu0 %v113
    %v238 = vpop.f32.mrb[0].mxu0
    %v239 = vadd.f32 %v82, %v238
    %v240 = vpop.f32.mrb[0].mxu0
    %v241 = vadd.f32 %v86, %v240
    %242 = vmatprep.mubr.f32.mxu0 0.0
    %243 = vmatmul.mubr.f32.gmra.mrb[0].mxu0 %v116
    %v244 = vpop.f32.mrb[0].mxu0
    %v245 = vadd.f32 %v82, %v244
    %v246 = vpop.f32.mrb[0].mxu0
    %v247 = vadd.f32 %v86, %v246
    %248 = vmatprep.mubr.f32.mxu0 0.0
    %249 = vmatmul.mubr.f32.gmra.mrb[0].mxu0 %v119
    %v250 = vpop.f32.mrb[0].mxu0
    %v251 = vadd.f32 %v82, %v250
    %v252 = vpop.f32.mrb[0].mxu0
    %v253 = vadd.f32 %v86, %v252
    %254 = vmatprep.mubr.f32.mxu0 0.0
    %255 = vmatmul.mubr.f32.gmra.mrb[0].mxu0 %v122
    %v256 = vpop.f32.mrb[0].mxu0
    %v257 = vadd.f32 %v82, %v256
    %v258 = vpop.f32.mrb[0].mxu0
    %v259 = vadd.f32 %v86, %v258
    %260 = vmatprep.mubr.f32.mxu0 0.0
    %261 = vmatmul.mubr.f32.gmra.mrb[0].mxu0 %v125
    %v262 = vpop.f32.mrb[0].mxu0
    %v263 = vadd.f32 %v82, %v262
    %v264 = vpop.f32.mrb[0].mxu0
    %v265 = vadd.f32 %v86, %v264
    %266 = vmatprep.mubr.f32.mxu0 0.0
    %267 = vmatmul.mubr.f32.gmra.mrb[0].mxu0 %v128
    %v268 = vpop.f32.mrb[0].mxu0
    %v269 = vadd.f32 %v82, %v268
    %v270 = vpop.f32.mrb[0].mxu0
    %v271 = vadd.f32 %v86, %v270
    %272 = vmatprep.mubr.f32.mxu0 0.0
    %273 = vmatmul.mubr.f32.gmra.mrb[0].mxu0 %v131
    %v274 = vpop.f32.mrb[0].mxu0
    %v275 = vadd.f32 %v82, %v274
    %v276 = vpop.f32.mrb[0].mxu0
    %v277 = vadd.f32 %v86, %v276
    %278 = vmatprep.mubr.f32.mxu0 0.0
    %279 = vmatmul.mubr.f32.gmra.mrb[0].mxu0 %v134
    %v280 = vpop.f32.mrb[0].mxu0
    %v281 = vadd.f32 %v82, %v280
    %v282 = vpop.f32.mrb[0].mxu0
    %v283 = vadd.f32 %v86, %v282
    %284 = vmatprep.mubr.f32.mxu0 0.0
    %285 = vmatmul.mubr.f32.gmra.mrb[0].mxu0 %v137
    %v286 = vpop.f32.mrb[0].mxu0
    %v287 = vadd.f32 %v82, %v286
    %v288 = vpop.f32.mrb[0].mxu0
    %v289 = vadd.f32 %v86, %v288
    %290 = vmatprep.mubr.f32.mxu0 0.0
    %291 = vmatmul.mubr.f32.gmra.mrb[0].mxu0 %v140
    %v292 = vpop.f32.mrb[0].mxu0
    %v293 = vadd.f32 %v82, %v292
    %v294 = vpop.f32.mrb[0].mxu0
    %v295 = vadd.f32 %v86, %v294
    %296 = vmatprep.mubr.f32.mxu0 0.0
    %297 = vmatmul.mubr.f32.gmra.mrb[0].mxu0 %v143
    %v298 = vpop.f32.mrb[0].mxu0
    %v299 = vadd.f32 %v82, %v298
    %v300 = vpop.f32.mrb[0].mxu0
    %v301 = vadd.f32 %v86, %v300
    %302 = vmatprep.mubr.f32.mxu0 0.0
    %303 = vmatmul.mubr.f32.gmra.mrb[0].mxu0 %v146
    %v304 = vpop.f32.mrb[0].mxu0
    %v305 = vadd.f32 %v82, %v304
    %v306 = vpop.f32.mrb[0].mxu0
    %v307 = vadd.f32 %v86, %v306
    %308 = vdwg.mxu0
    %309 = vmatprep.subr.mxu0 %v48
    %310 = vmatpush1.msra.mxu0 %v47
    %311 = vmatprep.subr.mxu0 %v52
    %312 = vmatpush1.msra.mxu0 %v51
    %313 = vmatprep.subr.mxu0 %v56
    %314 = vmatpush1.msra.mxu0 %v55
    %315 = vmatprep.subr.mxu0 %v60
    %316 = vmatpush1.msra.mxu0 %v59
    %317 = vmatprep.subr.mxu0 %v64
    %318 = vmatpush1.msra.mxu0 %v63
    %319 = vmatprep.subr.mxu0 %v68
    %320 = vmatpush1.msra.mxu0 %v67
    %321 = vmatprep.subr.mxu0 %v72
    %322 = vmatpush1.msra.mxu0 %v71
    %323 = vmatprep.subr.mxu0 %v76
    %324 = vmatpush1.msra.mxu0 %v75
    %325 = vmatprep.subr.mxu0 0.0
    %326 = vmatpush1.msra.mxu0 0.0
    %327 = vmatprep.subr.mxu0 0.0
    %328 = vmatpush1.msra.mxu0 0.0
    %329 = vmatprep.subr.mxu0 0.0
    %330 = vmatpush1.msra.mxu0 0.0
    %331 = vmatprep.subr.mxu0 0.0
    %332 = vmatpush1.msra.mxu0 0.0
    %333 = vmatprep.subr.mxu0 0.0
    %334 = vmatpush1.msra.mxu0 0.0
    %335 = vmatprep.subr.mxu0 0.0
    %336 = vmatpush1.msra.mxu0 0.0
    %337 = vmatprep.subr.mxu0 0.0
    %338 = vmatpush1.msra.mxu0 0.0
    %339 = vmatprep.subr.mxu0 0.0
    %340 = vmatpush1.msra.mxu0 0.0
    %341 = vmatprep.subr.mxu0 0.0
    %342 = vmatpush1.msra.mxu0 0.0
    %343 = vmatprep.subr.mxu0 0.0
    %344 = vmatpush1.msra.mxu0 0.0
    %345 = vmatprep.subr.mxu0 0.0
    %346 = vmatpush1.msra.mxu0 0.0
    %347 = vmatprep.subr.mxu0 0.0
    %348 = vmatpush1.msra.mxu0 0.0
    %349 = vmatprep.subr.mxu0 0.0
    %350 = vmatpush1.msra.mxu0 0.0
    %351 = vmatprep.subr.mxu0 0.0
    %352 = vmatpush1.msra.mxu0 0.0
    %353 = vmatprep.subr.mxu0 0.0
    %354 = vmatpush1.msra.mxu0 0.0
    %355 = vmatprep.subr.mxu0 0.0
    %356 = vmatpush1.msra.mxu0 0.0
    %357 = vmatprep.subr.mxu0 0.0
    %358 = vmatpush1.msra.mxu0 0.0
    %359 = vmatprep.subr.mxu0 0.0
    %360 = vmatpush1.msra.mxu0 0.0
    %361 = vmatprep.subr.mxu0 0.0
    %362 = vmatpush1.msra.mxu0 0.0
    %363 = vmatprep.subr.mxu0 0.0
    %364 = vmatpush1.msra.mxu0 0.0
    %365 = vmatprep.subr.mxu0 0.0
    %366 = vmatpush1.msra.mxu0 0.0
    %367 = vmatprep.subr.mxu0 0.0
    %368 = vmatpush1.msra.mxu0 0.0
    %369 = vmatprep.subr.mxu0 0.0
    %370 = vmatpush1.msra.mxu0 0.0
    %371 = vmatprep.subr.mxu0 0.0
    %372 = vmatpush1.msra.mxu0 0.0
    %373 = vmatprep.mubr.f32.mxu0 0.0
    %374 = vmatmul.mubr.f32.gmra.mrb[0].mxu0 %v101
    %v375 = vpop.f32.mrb[0].mxu0
    %v376 = vadd.f32 %v90, %v375
    %v377 = vpop.f32.mrb[0].mxu0
    %v378 = vadd.f32 %v94, %v377
    %379 = vmatprep.mubr.f32.mxu0 0.0
    %380 = vmatmul.mubr.f32.gmra.mrb[0].mxu0 %v104
    %v381 = vpop.f32.mrb[0].mxu0
    %v382 = vadd.f32 %v90, %v381
    %v383 = vpop.f32.mrb[0].mxu0
    %v384 = vadd.f32 %v94, %v383
    %385 = vmatprep.mubr.f32.mxu0 0.0
    %386 = vmatmul.mubr.f32.gmra.mrb[0].mxu0 %v107
    %v387 = vpop.f32.mrb[0].mxu0
    %v388 = vadd.f32 %v90, %v387
    %v389 = vpop.f32.mrb[0].mxu0
    %v390 = vadd.f32 %v94, %v389
    %391 = vmatprep.mubr.f32.mxu0 0.0
    %392 = vmatmul.mubr.f32.gmra.mrb[0].mxu0 %v110
    %v393 = vpop.f32.mrb[0].mxu0
    %v394 = vadd.f32 %v90, %v393
    %v395 = vpop.f32.mrb[0].mxu0
    %v396 = vadd.f32 %v94, %v395
    %397 = vmatprep.mubr.f32.mxu0 0.0
    %398 = vmatmul.mubr.f32.gmra.mrb[0].mxu0 %v113
    %v399 = vpop.f32.mrb[0].mxu0
    %v400 = vadd.f32 %v90, %v399
    %v401 = vpop.f32.mrb[0].mxu0
    %v402 = vadd.f32 %v94, %v401
    %403 = vmatprep.mubr.f32.mxu0 0.0
    %404 = vmatmul.mubr.f32.gmra.mrb[0].mxu0 %v116
    %v405 = vpop.f32.mrb[0].mxu0
    %v406 = vadd.f32 %v90, %v405
    %v407 = vpop.f32.mrb[0].mxu0
    %v408 = vadd.f32 %v94, %v407
    %409 = vmatprep.mubr.f32.mxu0 0.0
    %410 = vmatmul.mubr.f32.gmra.mrb[0].mxu0 %v119
    %v411 = vpop.f32.mrb[0].mxu0
    %v412 = vadd.f32 %v90, %v411
    %v413 = vpop.f32.mrb[0].mxu0
    %v414 = vadd.f32 %v94, %v413
    %415 = vmatprep.mubr.f32.mxu0 0.0
    %416 = vmatmul.mubr.f32.gmra.mrb[0].mxu0 %v122
    %v417 = vpop.f32.mrb[0].mxu0
    %v418 = vadd.f32 %v90, %v417
    %v419 = vpop.f32.mrb[0].mxu0
    %v420 = vadd.f32 %v94, %v419
    %421 = vmatprep.mubr.f32.mxu0 0.0
    %422 = vmatmul.mubr.f32.gmra.mrb[0].mxu0 %v125
    %v423 = vpop.f32.mrb[0].mxu0
    %v424 = vadd.f32 %v90, %v423
    %v425 = vpop.f32.mrb[0].mxu0
    %v426 = vadd.f32 %v94, %v425
    %427 = vmatprep.mubr.f32.mxu0 0.0
    %428 = vmatmul.mubr.f32.gmra.mrb[0].mxu0 %v128
    %v429 = vpop.f32.mrb[0].mxu0
    %v430 = vadd.f32 %v90, %v429
    %v431 = vpop.f32.mrb[0].mxu0
    %v432 = vadd.f32 %v94, %v431
    %433 = vmatprep.mubr.f32.mxu0 0.0
    %434 = vmatmul.mubr.f32.gmra.mrb[0].mxu0 %v131
    %v435 = vpop.f32.mrb[0].mxu0
    %v436 = vadd.f32 %v90, %v435
    %v437 = vpop.f32.mrb[0].mxu0
    %v438 = vadd.f32 %v94, %v437
    %439 = vmatprep.mubr.f32.mxu0 0.0
    %440 = vmatmul.mubr.f32.gmra.mrb[0].mxu0 %v134
    %v441 = vpop.f32.mrb[0].mxu0
    %v442 = vadd.f32 %v90, %v441
    %v443 = vpop.f32.mrb[0].mxu0
    %v444 = vadd.f32 %v94, %v443
    %445 = vmatprep.mubr.f32.mxu0 0.0
    %446 = vmatmul.mubr.f32.gmra.mrb[0].mxu0 %v137
    %v447 = vpop.f32.mrb[0].mxu0
    %v448 = vadd.f32 %v90, %v447
    %v449 = vpop.f32.mrb[0].mxu0
    %v450 = vadd.f32 %v94, %v449
    %451 = vmatprep.mubr.f32.mxu0 0.0
    %452 = vmatmul.mubr.f32.gmra.mrb[0].mxu0 %v140
    %v453 = vpop.f32.mrb[0].mxu0
    %v454 = vadd.f32 %v90, %v453
    %v455 = vpop.f32.mrb[0].mxu0
    %v456 = vadd.f32 %v94, %v455
    %457 = vmatprep.mubr.f32.mxu0 0.0
    %458 = vmatmul.mubr.f32.gmra.mrb[0].mxu0 %v143
    %v459 = vpop.f32.mrb[0].mxu0
    %v460 = vadd.f32 %v90, %v459
    %v461 = vpop.f32.mrb[0].mxu0
    %v462 = vadd.f32 %v94, %v461
    %463 = vmatprep.mubr.f32.mxu0 0.0
    %464 = vmatmul.mubr.f32.gmra.mrb[0].mxu0 %v146
    %v465 = vpop.f32.mrb[0].mxu0
    %v466 = vadd.f32 %v90, %v465
    %v467 = vpop.f32.mrb[0].mxu0
    %v468 = vadd.f32 %v94, %v467
    %469 = vdwg.mxu0
    %470 = vst [vmem:[#allocation5] sm:$0xff] %v215
    %471 = vst [vmem:[#allocation5 + $0x8] sm:$0xff] %v217
    %472 = vst [vmem:[#allocation5 + $0x10] sm:$0xff] %v376
    %473 = vst [vmem:[#allocation5 + $0x18] sm:$0xff] %v378
    %474 = vst [vmem:[#allocation5 + $0x20] sm:$0xff] %v221
    %475 = vst [vmem:[#allocation5 + $0x28] sm:$0xff] %v223
    %476 = vst [vmem:[#allocation5 + $0x30] sm:$0xff] %v382
    %477 = vst [vmem:[#allocation5 + $0x38] sm:$0xff] %v384
    %478 = vst [vmem:[#allocation5 + $0x40] sm:$0xff] %v227
    %479 = vst [vmem:[#allocation5 + $0x48] sm:$0xff] %v229
    %480 = vst [vmem:[#allocation5 + $0x50] sm:$0xff] %v388
    %481 = vst [vmem:[#allocation5 + $0x58] sm:$0xff] %v390
    %482 = vst [vmem:[#allocation5 + $0x60] sm:$0xff] %v233
    %483 = vst [vmem:[#allocation5 + $0x68] sm:$0xff] %v235
    %484 = vst [vmem:[#allocation5 + $0x70] sm:$0xff] %v394
    %485 = vst [vmem:[#allocation5 + $0x78] sm:$0xff] %v396
    %486 = vst [vmem:[#allocation5 + $0x80] sm:$0xff] %v239
    %487 = vst [vmem:[#allocation5 + $0x88] sm:$0xff] %v241
    %488 = vst [vmem:[#allocation5 + $0x90] sm:$0xff] %v400
    %489 = vst [vmem:[#allocation5 + $0x98] sm:$0xff] %v402
    %490 = vst [vmem:[#allocation5 + $0xa0] sm:$0xff] %v245
    %491 = vst [vmem:[#allocation5 + $0xa8] sm:$0xff] %v247
    %492 = vst [vmem:[#allocation5 + $0xb0] sm:$0xff] %v406
    %493 = vst [vmem:[#allocation5 + $0xb8] sm:$0xff] %v408
    %494 = vst [vmem:[#allocation5 + $0xc0] sm:$0xff] %v251
    %495 = vst [vmem:[#allocation5 + $0xc8] sm:$0xff] %v253
    %496 = vst [vmem:[#allocation5 + $0xd0] sm:$0xff] %v412
    %497 = vst [vmem:[#allocation5 + $0xd8] sm:$0xff] %v414
    %498 = vst [vmem:[#allocation5 + $0xe0] sm:$0xff] %v257
    %499 = vst [vmem:[#allocation5 + $0xe8] sm:$0xff] %v259
    %500 = vst [vmem:[#allocation5 + $0xf0] sm:$0xff] %v418
    %501 = vst [vmem:[#allocation5 + $0xf8] sm:$0xff] %v420
    %502 = vst [vmem:[#allocation5 + $0x100] sm:$0xff] %v263
    %503 = vst [vmem:[#allocation5 + $0x108] sm:$0xff] %v265
    %504 = vst [vmem:[#allocation5 + $0x110] sm:$0xff] %v424
    %505 = vst [vmem:[#allocation5 + $0x118] sm:$0xff] %v426
    %506 = vst [vmem:[#allocation5 + $0x120] sm:$0xff] %v269
    %507 = vst [vmem:[#allocation5 + $0x128] sm:$0xff] %v271
    %508 = vst [vmem:[#allocation5 + $0x130] sm:$0xff] %v430
    %509 = vst [vmem:[#allocation5 + $0x138] sm:$0xff] %v432
    %510 = vst [vmem:[#allocation5 + $0x140] sm:$0xff] %v275
    %511 = vst [vmem:[#allocation5 + $0x148] sm:$0xff] %v277
    %512 = vst [vmem:[#allocation5 + $0x150] sm:$0xff] %v436
    %513 = vst [vmem:[#allocation5 + $0x158] sm:$0xff] %v438
    %514 = vst [vmem:[#allocation5 + $0x160] sm:$0xff] %v281
    %515 = vst [vmem:[#allocation5 + $0x168] sm:$0xff] %v283
    %516 = vst [vmem:[#allocation5 + $0x170] sm:$0xff] %v442
    %517 = vst [vmem:[#allocation5 + $0x178] sm:$0xff] %v444
    %518 = vst [vmem:[#allocation5 + $0x180] sm:$0xff] %v287
    %519 = vst [vmem:[#allocation5 + $0x188] sm:$0xff] %v289
    %520 = vst [vmem:[#allocation5 + $0x190] sm:$0xff] %v448
    %521 = vst [vmem:[#allocation5 + $0x198] sm:$0xff] %v450
    %522 = vst [vmem:[#allocation5 + $0x1a0] sm:$0xff] %v293
    %523 = vst [vmem:[#allocation5 + $0x1a8] sm:$0xff] %v295
    %524 = vst [vmem:[#allocation5 + $0x1b0] sm:$0xff] %v454
    %525 = vst [vmem:[#allocation5 + $0x1b8] sm:$0xff] %v456
    %526 = vst [vmem:[#allocation5 + $0x1c0] sm:$0xff] %v299
    %527 = vst [vmem:[#allocation5 + $0x1c8] sm:$0xff] %v301
    %528 = vst [vmem:[#allocation5 + $0x1d0] sm:$0xff] %v460
    %529 = vst [vmem:[#allocation5 + $0x1d8] sm:$0xff] %v462
    %530 = vst [vmem:[#allocation5 + $0x1e0] sm:$0xff] %v305
    %531 = vst [vmem:[#allocation5 + $0x1e8] sm:$0xff] %v307
    %532 = vst [vmem:[#allocation5 + $0x1f0] sm:$0xff] %v466
    %533 = vst [vmem:[#allocation5 + $0x1f8] sm:$0xff] %v468
    // Predicated region
    $region18: #{tpu_custom_call.1} parent=1 // pred_check
      _
    $region19: #{tpu_custom_call.1} parent=1 // pred_check_branch
      %535 = sbr.rel (0) target = $region21
    $region20: #{tpu_custom_call.1} parent=1 // pred_region
      %s537 = ssub.s32 8192, 8192
      %538 = vsyncadd [#allocation4], %s537
      %s539 = sshll.u32 [#allocation5], 4
      %s540 = int_to_ptr.vmem [resolvable:$true] %s539
      %545 = dma.vmem_to_hbm [thread:$0]  %s540, 8192, %s3, [#allocation4], 512, 512, 32
    $region21: #{tpu_custom_call.1} parent=1 // pred_fallthru
      _
    // Predicated region
    $region22: #{tpu_custom_call.1} parent=1 // pred_check
      _
    $region23: #{tpu_custom_call.1} parent=1 // pred_check_branch
      %547 = sbr.rel (0) target = $region25
    $region24: #{tpu_custom_call.1} parent=1 // pred_region
      %548 = dma.done [#allocation4], 8192
    $region25: #{tpu_custom_call.1} parent=1 // pred_fallthru
      _
    %549 = vsyncpa [#allocation3], 1
    %550 = vsyncpa [#allocation4], 1

</llo_original>
